<compile_context>
chip_gen: v5e
topology: v5e:2x2
jax: 0.10.0
libtpu: 0.0.40
codegen_flags: <defaults>
</compile_context>

<pallas_src>
import jax
import jax.numpy as jnp
import numpy as np
from jax.experimental import pallas as pl
from jax.experimental.pallas import tpu as pltpu

HIDDEN = 32
LATENT = 16


# ----------------------------------------------------------------------------
# Fused kernel: diff-sum + rsample (mean/var/KL/reparam) + W_tree + W_graph
# ----------------------------------------------------------------------------
def _hiervgnn_kernel(x_tree_ref, y_tree_ref, x_graph_ref, y_graph_ref,
                     eps_t_ref, eps_g_ref,
                     w_mv_ref, b_mv_ref,
                     wt1_ref, wt2_ref, bt_ref,
                     wg1_ref, wg2_ref, bg_ref,
                     zt_ref, zg_ref, kl_ref):
    lz = LATENT
    x_tree = x_tree_ref[...]                        # (B, Lt, H) — read once
    x_graph = x_graph_ref[...]                      # (B, Lg, H) — read once
    bsz = x_tree.shape[0]

    # diff = y.sum(dim=1) - x.sum(dim=1), both branches stacked along rows.
    diff_t = jnp.sum(y_tree_ref[...], axis=1) - jnp.sum(x_tree, axis=1)
    diff_g = jnp.sum(y_graph_ref[...], axis=1) - jnp.sum(x_graph, axis=1)
    diff = jnp.concatenate([diff_t, diff_g], axis=0)            # (2B, H)

    # One MXU push for all four (mean/var x tree/graph) projections.
    proj = (jnp.dot(diff, w_mv_ref[...], preferred_element_type=jnp.float32)
            + b_mv_ref[...])                                    # (2B, 4*lz)
    mean_t = proj[:bsz, 0:lz]
    logvar_t = -jnp.abs(proj[:bsz, lz:2 * lz])
    mean_g = proj[bsz:, 2 * lz:3 * lz]
    logvar_g = -jnp.abs(proj[bsz:, 3 * lz:4 * lz])

    kl = -0.5 * (
        jnp.sum(1.0 + logvar_t - mean_t * mean_t - jnp.exp(logvar_t))
        + jnp.sum(1.0 + logvar_g - mean_g * mean_g - jnp.exp(logvar_g))
    ) / bsz
    kl_ref[0, 0] = kl

    # Reparameterization — z stays in vregs, never written to HBM.
    z_t = mean_t + jnp.exp(logvar_t * 0.5) * eps_t_ref[...]     # (B, lz)
    z_g = mean_g + jnp.exp(logvar_g * 0.5) * eps_g_ref[...]     # (B, lz)

    # relu(cat([x, z.expand(L)], -1) @ W + b) == relu(x @ W1 + (z @ W2 + b))
    def branch(x, z, w1, w2, b, out_ref):
        b_, l_, h_ = x.shape
        h_out = w1.shape[1]
        cond = jnp.dot(z, w2, preferred_element_type=jnp.float32) + b  # (B, Ho)
        h = jnp.dot(x.reshape(b_ * l_, h_), w1,
                    preferred_element_type=jnp.float32)                # (B*L, Ho)
        h = h.reshape(b_, l_, h_out) + cond[:, None, :]
        out_ref[...] = jnp.maximum(h, 0.0)

    branch(x_tree, z_t, wt1_ref[...], wt2_ref[...], bt_ref[...], zt_ref)
    branch(x_graph, z_g, wg1_ref[...], wg2_ref[...], bg_ref[...], zg_ref)


# ----------------------------------------------------------------------------
# Wrapper: weight packing + single pallas_call (no grid, single-buffered)
# ----------------------------------------------------------------------------
def hiervgnn_core_forward(params, x_tree, x_graph, y_tree, y_graph,
                          eps_tree, eps_graph, beta):
    B, Lt, H = x_tree.shape
    _, Lg, _ = x_graph.shape

    # Pack the four tiny mean/var projections column-wise: (H, 4*LATENT).
    w_mv = jnp.concatenate([params["T_mean_w"], params["T_var_w"],
                            params["G_mean_w"], params["G_var_w"]], axis=1)
    b_mv = jnp.concatenate([params["T_mean_b"], params["T_var_b"],
                            params["G_mean_b"], params["G_var_b"]], axis=1)

    # Split the concat-Linear weights of W_tree / W_graph.
    wt1, wt2 = params["W_tree_w"][:H], params["W_tree_w"][H:]
    wg1, wg2 = params["W_graph_w"][:H], params["W_graph_w"][H:]

    vmem = pl.BlockSpec(memory_space=pltpu.MemorySpace.VMEM)
    smem = pl.BlockSpec(memory_space=pltpu.MemorySpace.SMEM)

    z_tree_vecs, z_graph_vecs, kl = pl.pallas_call(
        _hiervgnn_kernel,
        out_shape=(jax.ShapeDtypeStruct((B, Lt, H), jnp.float32),
                   jax.ShapeDtypeStruct((B, Lg, H), jnp.float32),
                   jax.ShapeDtypeStruct((1, 1), jnp.float32)),
        in_specs=[vmem] * 14,
        out_specs=(vmem, vmem, smem),
    )(x_tree, y_tree, x_graph, y_graph, eps_tree, eps_graph,
      w_mv, b_mv, wt1, wt2, params["W_tree_b"], wg1, wg2, params["W_graph_b"])

    kl_div = kl[0, 0]
    # TODO(synk): decoder loss (HierMPNDecoder) not implementable in Pallas;
    # return the conditioned vectors + beta-weighted KL instead.
    return z_tree_vecs, z_graph_vecs, kl_div, beta * kl_div


# ----------------------------------------------------------------------------
# Parameter init (deterministic, PyTorch-Linear-like uniform(-1/sqrt(in), ...))
# ----------------------------------------------------------------------------
def init_linear(key, fan_in, fan_out):
    kw, kb = jax.random.split(key)
    bound = 1.0 / np.sqrt(fan_in)
    w = jax.random.uniform(kw, (fan_in, fan_out), jnp.float32, -bound, bound)
    b = jax.random.uniform(kb, (1, fan_out), jnp.float32, -bound, bound)
    return w, b


# ----------------------------------------------------------------------------
# Pure-JAX reference for correctness check
# ----------------------------------------------------------------------------
def ref_forward(params, x_tree, x_graph, y_tree, y_graph, eps_tree, eps_graph):
    def rsample(x, y, wm, bm, wv, bv, eps):
        diff = y.sum(1) - x.sum(1)
        mean = diff @ wm + bm
        logvar = -jnp.abs(diff @ wv + bv)
        kl = -0.5 * jnp.sum(1.0 + logvar - mean * mean
                            - jnp.exp(logvar)) / x.shape[0]
        return mean + jnp.exp(logvar / 2.0) * eps, kl

    def wmod(x, z, w, b):
        L = x.shape[1]
        zexp = jnp.broadcast_to(z[:, None, :], (z.shape[0], L, z.shape[1]))
        cat = jnp.concatenate([x, zexp], axis=-1)
        return jnp.maximum(cat @ w + b, 0.0)

    zt, klt = rsample(x_tree, y_tree, params["T_mean_w"], params["T_mean_b"],
                      params["T_var_w"], params["T_var_b"], eps_tree)
    zg, klg = rsample(x_graph, y_graph, params["G_mean_w"], params["G_mean_b"],
                      params["G_var_w"], params["G_var_b"], eps_graph)
    return (wmod(x_tree, zt, params["W_tree_w"], params["W_tree_b"]),
            wmod(x_graph, zg, params["W_graph_w"], params["W_graph_b"]),
            klt + klg)


if __name__ == "__main__":
    key = jax.random.PRNGKey(0)
    B, Lt_x, Lt_y, Lg_x, Lg_y = 2, 8, 6, 12, 10
    H, Lz = HIDDEN, LATENT

    keys = jax.random.split(key, 16)
    # "encoder outputs" (stand-ins for stack_pad_tensor(...) results)
    x_tree = jax.random.normal(keys[0], (B, Lt_x, H), jnp.float32)
    x_graph = jax.random.normal(keys[1], (B, Lg_x, H), jnp.float32)
    y_tree = jax.random.normal(keys[2], (B, Lt_y, H), jnp.float32)
    y_graph = jax.random.normal(keys[3], (B, Lg_y, H), jnp.float32)
    # deterministic reparameterization noise (torch.randn_like in rsample)
    eps_tree = jax.random.normal(keys[4], (B, Lz), jnp.float32)
    eps_graph = jax.random.normal(keys[5], (B, Lz), jnp.float32)

    params = {}
    params["T_mean_w"], params["T_mean_b"] = init_linear(keys[6], H, Lz)
    params["T_var_w"], params["T_var_b"] = init_linear(keys[7], H, Lz)
    params["G_mean_w"], params["G_mean_b"] = init_linear(keys[8], H, Lz)
    params["G_var_w"], params["G_var_b"] = init_linear(keys[9], H, Lz)
    params["W_tree_w"], params["W_tree_b"] = init_linear(keys[10], H + Lz, H)
    params["W_graph_w"], params["W_graph_b"] = init_linear(keys[11], H + Lz, H)

    beta = jnp.float32(0.3)
    z_tree_vecs, z_graph_vecs, kl_div, weighted_kl = jax.block_until_ready(
        hiervgnn_core_forward(params, x_tree, x_graph, y_tree, y_graph,
                              eps_tree, eps_graph, beta))

    ref_tree, ref_graph, ref_kl = ref_forward(
        params, x_tree, x_graph, y_tree, y_graph, eps_tree, eps_graph)

    assert np.allclose(np.asarray(z_tree_vecs), np.asarray(ref_tree),
                       rtol=1e-4, atol=1e-4)
    assert np.allclose(np.asarray(z_graph_vecs), np.asarray(ref_graph),
                       rtol=1e-4, atol=1e-4)
    assert np.allclose(float(kl_div), float(ref_kl), rtol=1e-4, atol=1e-4)

    print("KERNEL_OK")
</pallas_src>

<mosaic_0001>
module attributes {stable_mosaic.version = 11 : i64} {
  func.func @_hiervgnn_kernel(%arg0: memref<2x8x32xf32, #tpu.memory_space<vmem>>, %arg1: memref<2x6x32xf32, #tpu.memory_space<vmem>>, %arg2: memref<2x12x32xf32, #tpu.memory_space<vmem>>, %arg3: memref<2x10x32xf32, #tpu.memory_space<vmem>>, %arg4: memref<2x16xf32, #tpu.memory_space<vmem>>, %arg5: memref<2x16xf32, #tpu.memory_space<vmem>>, %arg6: memref<32x64xf32, #tpu.memory_space<vmem>>, %arg7: memref<1x64xf32, #tpu.memory_space<vmem>>, %arg8: memref<32x32xf32, #tpu.memory_space<vmem>>, %arg9: memref<16x32xf32, #tpu.memory_space<vmem>>, %arg10: memref<1x32xf32, #tpu.memory_space<vmem>>, %arg11: memref<32x32xf32, #tpu.memory_space<vmem>>, %arg12: memref<16x32xf32, #tpu.memory_space<vmem>>, %arg13: memref<1x32xf32, #tpu.memory_space<vmem>>, %arg14: memref<2x8x32xf32, #tpu.memory_space<vmem>>, %arg15: memref<2x12x32xf32, #tpu.memory_space<vmem>>, %arg16: memref<1x1xf32, #tpu.memory_space<smem>>) attributes {dimension_semantics = [], scalar_prefetch = 0 : i64, scratch_operands = 0 : i64, tpu.core_type = #tpu.core_type<tc>} {
    %c0 = arith.constant 0 : index
    %c0_0 = arith.constant 0 : index
    %c0_1 = arith.constant 0 : index
    %0 = vector.load %arg0[%c0, %c0_0, %c0_1] : memref<2x8x32xf32, #tpu.memory_space<vmem>>, vector<2x8x32xf32>
    %c0_2 = arith.constant 0 : index
    %c0_3 = arith.constant 0 : index
    %c0_4 = arith.constant 0 : index
    %1 = vector.load %arg2[%c0_2, %c0_3, %c0_4] : memref<2x12x32xf32, #tpu.memory_space<vmem>>, vector<2x12x32xf32>
    %c0_5 = arith.constant 0 : index
    %c0_6 = arith.constant 0 : index
    %c0_7 = arith.constant 0 : index
    %2 = vector.load %arg1[%c0_5, %c0_6, %c0_7] : memref<2x6x32xf32, #tpu.memory_space<vmem>>, vector<2x6x32xf32>
    %cst = arith.constant dense<0.000000e+00> : vector<2x32xf32>
    %3 = vector.multi_reduction <add>, %2, %cst [1] : vector<2x6x32xf32> to vector<2x32xf32>
    %cst_8 = arith.constant dense<0.000000e+00> : vector<2x32xf32>
    %4 = vector.multi_reduction <add>, %0, %cst_8 [1] : vector<2x8x32xf32> to vector<2x32xf32>
    %5 = arith.subf %3, %4 : vector<2x32xf32>
    %c0_9 = arith.constant 0 : index
    %c0_10 = arith.constant 0 : index
    %c0_11 = arith.constant 0 : index
    %6 = vector.load %arg3[%c0_9, %c0_10, %c0_11] : memref<2x10x32xf32, #tpu.memory_space<vmem>>, vector<2x10x32xf32>
    %cst_12 = arith.constant dense<0.000000e+00> : vector<2x32xf32>
    %7 = vector.multi_reduction <add>, %6, %cst_12 [1] : vector<2x10x32xf32> to vector<2x32xf32>
    %cst_13 = arith.constant dense<0.000000e+00> : vector<2x32xf32>
    %8 = vector.multi_reduction <add>, %1, %cst_13 [1] : vector<2x12x32xf32> to vector<2x32xf32>
    %9 = arith.subf %7, %8 : vector<2x32xf32>
    %10 = tpu.concatenate %5, %9 in 0 : vector<2x32xf32>, vector<2x32xf32> -> vector<4x32xf32>
    %c0_14 = arith.constant 0 : index
    %c0_15 = arith.constant 0 : index
    %11 = vector.load %arg6[%c0_14, %c0_15] : memref<32x64xf32, #tpu.memory_space<vmem>>, vector<32x64xf32>
    %cst_16 = arith.constant dense<0.000000e+00> : vector<4x64xf32>
    %12 = tpu.matmul %10, %11, %cst_16 {dimension_numbers = #tpu.dot_dimension_numbers<[1], [0], [0], [1], [0, 0, 1, 1], [], []>} : vector<4x32xf32>, vector<32x64xf32>, vector<4x64xf32> -> vector<4x64xf32>
    %c0_17 = arith.constant 0 : index
    %c0_18 = arith.constant 0 : index
    %13 = vector.load %arg7[%c0_17, %c0_18] : memref<1x64xf32, #tpu.memory_space<vmem>>, vector<1x64xf32>
    %14 = vector.broadcast %13 : vector<1x64xf32> to vector<4x64xf32>
    %15 = arith.addf %12, %14 : vector<4x64xf32>
    %16 = vector.extract_strided_slice %15 {offsets = [0, 0], sizes = [2, 16], strides = [1, 1]} : vector<4x64xf32> to vector<2x16xf32>
    %17 = vector.extract_strided_slice %15 {offsets = [0, 16], sizes = [2, 16], strides = [1, 1]} : vector<4x64xf32> to vector<2x16xf32>
    %18 = math.absf %17 : vector<2x16xf32>
    %cst_19 = arith.constant 0.000000e+00 : f32
    %19 = vector.broadcast %cst_19 : f32 to vector<2x16xf32>
    %20 = arith.subf %19, %18 : vector<2x16xf32>
    %21 = vector.extract_strided_slice %15 {offsets = [2, 32], sizes = [2, 16], strides = [1, 1]} : vector<4x64xf32> to vector<2x16xf32>
    %22 = vector.extract_strided_slice %15 {offsets = [2, 48], sizes = [2, 16], strides = [1, 1]} : vector<4x64xf32> to vector<2x16xf32>
    %23 = math.absf %22 : vector<2x16xf32>
    %cst_20 = arith.constant 0.000000e+00 : f32
    %24 = vector.broadcast %cst_20 : f32 to vector<2x16xf32>
    %25 = arith.subf %24, %23 : vector<2x16xf32>
    %cst_21 = arith.constant 1.000000e+00 : f32
    %26 = vector.broadcast %cst_21 : f32 to vector<2x16xf32>
    %27 = arith.addf %26, %20 : vector<2x16xf32>
    %28 = arith.mulf %16, %16 : vector<2x16xf32>
    %29 = arith.subf %27, %28 : vector<2x16xf32>
    %30 = math.exp %20 : vector<2x16xf32>
    %31 = arith.subf %29, %30 : vector<2x16xf32>
    %32 = vector.shape_cast %31 : vector<2x16xf32> to vector<1x2x16xf32>
    %cst_22 = arith.constant dense<0.000000e+00> : vector<1xf32>
    %33 = vector.multi_reduction <add>, %32, %cst_22 [1, 2] : vector<1x2x16xf32> to vector<1xf32>
    %34 = vector.shape_cast %33 : vector<1xf32> to vector<1x1x1xf32>
    %35 = vector.extract %34[0, 0, 0] : f32 from vector<1x1x1xf32>
    %cst_23 = arith.constant 1.000000e+00 : f32
    %36 = vector.broadcast %cst_23 : f32 to vector<2x16xf32>
    %37 = arith.addf %36, %25 : vector<2x16xf32>
    %38 = arith.mulf %21, %21 : vector<2x16xf32>
    %39 = arith.subf %37, %38 : vector<2x16xf32>
    %40 = math.exp %25 : vector<2x16xf32>
    %41 = arith.subf %39, %40 : vector<2x16xf32>
    %42 = vector.shape_cast %41 : vector<2x16xf32> to vector<1x2x16xf32>
    %cst_24 = arith.constant dense<0.000000e+00> : vector<1xf32>
    %43 = vector.multi_reduction <add>, %42, %cst_24 [1, 2] : vector<1x2x16xf32> to vector<1xf32>
    %44 = vector.shape_cast %43 : vector<1xf32> to vector<1x1x1xf32>
    %45 = vector.extract %44[0, 0, 0] : f32 from vector<1x1x1xf32>
    %46 = arith.addf %35, %45 : f32
    %cst_25 = arith.constant -5.000000e-01 : f32
    %47 = arith.mulf %cst_25, %46 : f32
    %cst_26 = arith.constant 2.000000e+00 : f32
    %48 = arith.divf %47, %cst_26 : f32
    %c0_27 = arith.constant 0 : index
    %c0_28 = arith.constant 0 : index
    %49 = memref.load %arg16[%c0_27, %c0_28] : memref<1x1xf32, #tpu.memory_space<smem>>
    memref.store %48, %arg16[%c0_27, %c0_28] : memref<1x1xf32, #tpu.memory_space<smem>>
    %cst_29 = arith.constant 5.000000e-01 : f32
    %50 = vector.broadcast %cst_29 : f32 to vector<2x16xf32>
    %51 = arith.mulf %20, %50 : vector<2x16xf32>
    %52 = math.exp %51 : vector<2x16xf32>
    %c0_30 = arith.constant 0 : index
    %c0_31 = arith.constant 0 : index
    %53 = vector.load %arg4[%c0_30, %c0_31] : memref<2x16xf32, #tpu.memory_space<vmem>>, vector<2x16xf32>
    %54 = arith.mulf %52, %53 : vector<2x16xf32>
    %55 = arith.addf %16, %54 : vector<2x16xf32>
    %cst_32 = arith.constant 5.000000e-01 : f32
    %56 = vector.broadcast %cst_32 : f32 to vector<2x16xf32>
    %57 = arith.mulf %25, %56 : vector<2x16xf32>
    %58 = math.exp %57 : vector<2x16xf32>
    %c0_33 = arith.constant 0 : index
    %c0_34 = arith.constant 0 : index
    %59 = vector.load %arg5[%c0_33, %c0_34] : memref<2x16xf32, #tpu.memory_space<vmem>>, vector<2x16xf32>
    %60 = arith.mulf %58, %59 : vector<2x16xf32>
    %61 = arith.addf %21, %60 : vector<2x16xf32>
    %c0_35 = arith.constant 0 : index
    %c0_36 = arith.constant 0 : index
    %62 = vector.load %arg8[%c0_35, %c0_36] : memref<32x32xf32, #tpu.memory_space<vmem>>, vector<32x32xf32>
    %c0_37 = arith.constant 0 : index
    %c0_38 = arith.constant 0 : index
    %63 = vector.load %arg9[%c0_37, %c0_38] : memref<16x32xf32, #tpu.memory_space<vmem>>, vector<16x32xf32>
    %c0_39 = arith.constant 0 : index
    %c0_40 = arith.constant 0 : index
    %64 = vector.load %arg10[%c0_39, %c0_40] : memref<1x32xf32, #tpu.memory_space<vmem>>, vector<1x32xf32>
    %cst_41 = arith.constant dense<0.000000e+00> : vector<2x32xf32>
    %65 = tpu.matmul %55, %63, %cst_41 {dimension_numbers = #tpu.dot_dimension_numbers<[1], [0], [0], [1], [0, 0, 1, 1], [], []>} : vector<2x16xf32>, vector<16x32xf32>, vector<2x32xf32> -> vector<2x32xf32>
    %66 = vector.broadcast %64 : vector<1x32xf32> to vector<2x32xf32>
    %67 = arith.addf %65, %66 : vector<2x32xf32>
    %68 = vector.shape_cast %0 : vector<2x8x32xf32> to vector<16x32xf32>
    %cst_42 = arith.constant dense<0.000000e+00> : vector<16x32xf32>
    %69 = tpu.matmul %68, %62, %cst_42 {dimension_numbers = #tpu.dot_dimension_numbers<[1], [0], [0], [1], [0, 0, 1, 1], [], []>} : vector<16x32xf32>, vector<32x32xf32>, vector<16x32xf32> -> vector<16x32xf32>
    %70 = vector.shape_cast %69 : vector<16x32xf32> to vector<2x8x32xf32>
    %71 = vector.shape_cast %67 : vector<2x32xf32> to vector<2x1x32xf32>
    %72 = vector.broadcast %71 : vector<2x1x32xf32> to vector<2x8x32xf32>
    %73 = arith.addf %70, %72 : vector<2x8x32xf32>
    %cst_43 = arith.constant 0.000000e+00 : f32
    %74 = vector.broadcast %cst_43 : f32 to vector<2x8x32xf32>
    %75 = arith.maximumf %73, %74 : vector<2x8x32xf32>
    %c0_44 = arith.constant 0 : index
    %c0_45 = arith.constant 0 : index
    %c0_46 = arith.constant 0 : index
    %76 = vector.load %arg14[%c0_44, %c0_45, %c0_46] : memref<2x8x32xf32, #tpu.memory_space<vmem>>, vector<2x8x32xf32>
    tpu.vector_store %arg14[%c0_44, %c0_45, %c0_46], %75 {strides = array<i32>} : memref<2x8x32xf32, #tpu.memory_space<vmem>>, vector<2x8x32xf32>,
    %c0_47 = arith.constant 0 : index
    %c0_48 = arith.constant 0 : index
    %77 = vector.load %arg11[%c0_47, %c0_48] : memref<32x32xf32, #tpu.memory_space<vmem>>, vector<32x32xf32>
    %c0_49 = arith.constant 0 : index
    %c0_50 = arith.constant 0 : index
    %78 = vector.load %arg12[%c0_49, %c0_50] : memref<16x32xf32, #tpu.memory_space<vmem>>, vector<16x32xf32>
    %c0_51 = arith.constant 0 : index
    %c0_52 = arith.constant 0 : index
    %79 = vector.load %arg13[%c0_51, %c0_52] : memref<1x32xf32, #tpu.memory_space<vmem>>, vector<1x32xf32>
    %cst_53 = arith.constant dense<0.000000e+00> : vector<2x32xf32>
    %80 = tpu.matmul %61, %78, %cst_53 {dimension_numbers = #tpu.dot_dimension_numbers<[1], [0], [0], [1], [0, 0, 1, 1], [], []>} : vector<2x16xf32>, vector<16x32xf32>, vector<2x32xf32> -> vector<2x32xf32>
    %81 = vector.broadcast %79 : vector<1x32xf32> to vector<2x32xf32>
    %82 = arith.addf %80, %81 : vector<2x32xf32>
    %83 = vector.shape_cast %1 : vector<2x12x32xf32> to vector<24x32xf32>
    %cst_54 = arith.constant dense<0.000000e+00> : vector<24x32xf32>
    %84 = tpu.matmul %83, %77, %cst_54 {dimension_numbers = #tpu.dot_dimension_numbers<[1], [0], [0], [1], [0, 0, 1, 1], [], []>} : vector<24x32xf32>, vector<32x32xf32>, vector<24x32xf32> -> vector<24x32xf32>
    %85 = vector.shape_cast %84 : vector<24x32xf32> to vector<2x12x32xf32>
    %86 = vector.shape_cast %82 : vector<2x32xf32> to vector<2x1x32xf32>
    %87 = vector.broadcast %86 : vector<2x1x32xf32> to vector<2x12x32xf32>
    %88 = arith.addf %85, %87 : vector<2x12x32xf32>
    %cst_55 = arith.constant 0.000000e+00 : f32
    %89 = vector.broadcast %cst_55 : f32 to vector<2x12x32xf32>
    %90 = arith.maximumf %88, %89 : vector<2x12x32xf32>
    %c0_56 = arith.constant 0 : index
    %c0_57 = arith.constant 0 : index
    %c0_58 = arith.constant 0 : index
    %91 = vector.load %arg15[%c0_56, %c0_57, %c0_58] : memref<2x12x32xf32, #tpu.memory_space<vmem>>, vector<2x12x32xf32>
    tpu.vector_store %arg15[%c0_56, %c0_57, %c0_58], %90 {strides = array<i32>} : memref<2x12x32xf32, #tpu.memory_space<vmem>>, vector<2x12x32xf32>,
    return
  }
}

</mosaic_0001>

<llo_original>
// kernel: tpu_custom_call.1
$region0: #{tpu_custom_call.1}
  #allocation0 [shape = 'u32[]', space=smem, size = 0x4, offset = 0x4, fixed_abs, tag = 'smem constant byte address 0x4 - core index']
  #allocation1 [shape = 'u32[72,128]{1,0:T(1,128)}', space=vmem, size = 0x9000, scoped, tag = 'internal scratch']
  %s0 = inlined_call_operand.vmem [shape: f32[2,8,32], index: 0, kind: input, shape index: {}]
  %s1 = inlined_call_operand.vmem [shape: f32[2,6,32], index: 1, kind: input, shape index: {}]
  %s2 = inlined_call_operand.vmem [shape: f32[2,12,32], index: 2, kind: input, shape index: {}]
  %s3 = inlined_call_operand.vmem [shape: f32[2,10,32], index: 3, kind: input, shape index: {}]
  %s4 = inlined_call_operand.vmem [shape: f32[2,16], index: 4, kind: input, shape index: {}]
  %s5 = inlined_call_operand.vmem [shape: f32[2,16], index: 5, kind: input, shape index: {}]
  %s6 = inlined_call_operand.vmem [shape: f32[32,64], index: 6, kind: input, shape index: {}]
  %s7 = inlined_call_operand.vmem [shape: f32[1,64], index: 7, kind: input, shape index: {}]
  %s8 = inlined_call_operand.vmem [shape: f32[32,32], index: 8, kind: input, shape index: {}]
  %s9 = inlined_call_operand.hbm [shape: f32[16,32], index: 9, kind: input, shape index: {}]
  %s10 = inlined_call_operand.vmem [shape: f32[1,32], index: 10, kind: input, shape index: {}]
  %s11 = inlined_call_operand.hbm [shape: f32[32,32], index: 11, kind: input, shape index: {}]
  %s12 = inlined_call_operand.hbm [shape: f32[16,32], index: 12, kind: input, shape index: {}]
  %s13 = inlined_call_operand.vmem [shape: f32[1,32], index: 13, kind: input, shape index: {}]
  %s14 = inlined_call_operand.hbm [shape: f32[2,8,32], index: 14, kind: output, shape index: {0}]
  %s15 = inlined_call_operand.vmem [shape: f32[2,12,32], index: 15, kind: output, shape index: {1}]
  %s16 = inlined_call_operand.hbm [shape: f32[1,1], index: 16, kind: output, shape index: {2}]
  %17 = xla_tuple %s14, %s15, %s16
  %s18 = sld [smem:[#allocation0]]
  $region94: #{tpu_custom_call.1} parent=0
    _
  %s20 = ssub.s32 1, %s18
  %s21 = scalar_select 0, %s20, %s18
  $region1: #{tpu_custom_call.1} parent=0
    #allocation2 [shape = 'u8[8192]{0}', space=vmem, size = 0x2000, scoped, tag = 'input window, operand 9, single buffered']
    #allocation3 [shape = 's32[1]{0}', space=sflag, size = 0x4, scoped, tag = 'scoped memory for tpu_custom_call.1']
    #allocation4 [shape = 's32[1]{0}', space=sflag, size = 0x4, scoped, tag = 'scoped memory for tpu_custom_call.1']
    #allocation5 [shape = 's32[1]{0}', space=sflag, size = 0x4, scoped, tag = 'scoped memory for tpu_custom_call.1']
    #allocation6 [shape = 'u8[16384]{0}', space=vmem, size = 0x4000, scoped, tag = 'input window, operand 11, single buffered']
    #allocation7 [shape = 's32[1]{0}', space=sflag, size = 0x4, scoped, tag = 'scoped memory for tpu_custom_call.1']
    #allocation8 [shape = 'u8[8192]{0}', space=vmem, size = 0x2000, scoped, tag = 'input window, operand 12, single buffered']
    #allocation9 [shape = 'u8[8192]{0}', space=vmem, size = 0x2000, scoped, tag = 'output window, operand 0, single buffered']
    #allocation10 [shape = 'u8[512]{0}', space=smem, size = 0x200, scoped, tag = 'output window, operand 2, single buffered']
    %22 = vsyncpa [#allocation3], 0
    %23 = vsyncpa [#allocation7], 0
    %24 = vsyncpa [#allocation4], 0
    %25 = vsyncpa [#allocation5], 0
    // Predicated region
    $region2: #{tpu_custom_call.1} parent=1 // pred_check
      _
    $region3: #{tpu_custom_call.1} parent=1 // pred_check_branch
      %27 = sbr.rel (0) target = $region5
    $region4: #{tpu_custom_call.1} parent=1 // pred_region
      _
    $region5: #{tpu_custom_call.1} parent=1 // pred_fallthru
      _
    // Predicated region
    $region6: #{tpu_custom_call.1} parent=1 // pred_check
      _
    $region7: #{tpu_custom_call.1} parent=1 // pred_check_branch
      %29 = sbr.rel (0) target = $region9
    $region8: #{tpu_custom_call.1} parent=1 // pred_region
      _
    $region9: #{tpu_custom_call.1} parent=1 // pred_fallthru
      _
    // Predicated region
    $region10: #{tpu_custom_call.1} parent=1 // pred_check
      _
    $region11: #{tpu_custom_call.1} parent=1 // pred_check_branch
      %31 = sbr.rel (0) target = $region13
    $region12: #{tpu_custom_call.1} parent=1 // pred_region
      _
    $region13: #{tpu_custom_call.1} parent=1 // pred_fallthru
      _
    // Predicated region
    $region14: #{tpu_custom_call.1} parent=1 // pred_check
      _
    $region15: #{tpu_custom_call.1} parent=1 // pred_check_branch
      %33 = sbr.rel (0) target = $region17
    $region16: #{tpu_custom_call.1} parent=1 // pred_region
      _
    $region17: #{tpu_custom_call.1} parent=1 // pred_fallthru
      _
    // Predicated region
    $region18: #{tpu_custom_call.1} parent=1 // pred_check
      _
    $region19: #{tpu_custom_call.1} parent=1 // pred_check_branch
      %35 = sbr.rel (0) target = $region21
    $region20: #{tpu_custom_call.1} parent=1 // pred_region
      _
    $region21: #{tpu_custom_call.1} parent=1 // pred_fallthru
      _
    // Predicated region
    $region22: #{tpu_custom_call.1} parent=1 // pred_check
      _
    $region23: #{tpu_custom_call.1} parent=1 // pred_check_branch
      %37 = sbr.rel (0) target = $region25
    $region24: #{tpu_custom_call.1} parent=1 // pred_region
      _
    $region25: #{tpu_custom_call.1} parent=1 // pred_fallthru
      _
    // Predicated region
    $region26: #{tpu_custom_call.1} parent=1 // pred_check
      _
    $region27: #{tpu_custom_call.1} parent=1 // pred_check_branch
      %39 = sbr.rel (0) target = $region29
    $region28: #{tpu_custom_call.1} parent=1 // pred_region
      _
    $region29: #{tpu_custom_call.1} parent=1 // pred_fallthru
      _
    // Predicated region
    $region30: #{tpu_custom_call.1} parent=1 // pred_check
      _
    $region31: #{tpu_custom_call.1} parent=1 // pred_check_branch
      %41 = sbr.rel (0) target = $region33
    $region32: #{tpu_custom_call.1} parent=1 // pred_region
      _
    $region33: #{tpu_custom_call.1} parent=1 // pred_fallthru
      _
    // Predicated region
    $region34: #{tpu_custom_call.1} parent=1 // pred_check
      _
    $region35: #{tpu_custom_call.1} parent=1 // pred_check_branch
      %43 = sbr.rel (0) target = $region37
    $region36: #{tpu_custom_call.1} parent=1 // pred_region
      _
    $region37: #{tpu_custom_call.1} parent=1 // pred_fallthru
      _
    // Predicated region
    $region38: #{tpu_custom_call.1} parent=1 // pred_check
      _
    $region39: #{tpu_custom_call.1} parent=1 // pred_check_branch
      %45 = sbr.rel (0) target = $region41
    $region40: #{tpu_custom_call.1} parent=1 // pred_region
      %47 = vsyncadd [#allocation3], 0
      %s48 = sshll.u32 %s9, 4
      %s49 = int_to_ptr.hbm [resolvable:$true] %s48
      %s50 = sshll.u32 [#allocation2], 4
      %s51 = int_to_ptr.vmem [resolvable:$true] %s50
      %56 = dma.hbm_to_vmem [thread:$0]  %s49, 256, %s51, [#allocation3], 128, 128, 8
    $region41: #{tpu_custom_call.1} parent=1 // pred_fallthru
      _
    // Predicated region
    $region42: #{tpu_custom_call.1} parent=1 // pred_check
      _
    $region43: #{tpu_custom_call.1} parent=1 // pred_check_branch
      %58 = sbr.rel (0) target = $region45
    $region44: #{tpu_custom_call.1} parent=1 // pred_region
      _
    $region45: #{tpu_custom_call.1} parent=1 // pred_fallthru
      _
    // Predicated region
    $region46: #{tpu_custom_call.1} parent=1 // pred_check
      _
    $region47: #{tpu_custom_call.1} parent=1 // pred_check_branch
      %60 = sbr.rel (0) target = $region49
    $region48: #{tpu_custom_call.1} parent=1 // pred_region
      %62 = vsyncadd [#allocation7], 0
      %s63 = sshll.u32 %s11, 4
      %s64 = int_to_ptr.hbm [resolvable:$true] %s63
      %s65 = sshll.u32 [#allocation6], 4
      %s66 = int_to_ptr.vmem [resolvable:$true] %s65
      %71 = dma.hbm_to_vmem [thread:$0]  %s64, 512, %s66, [#allocation7], 128, 128, 8
    $region49: #{tpu_custom_call.1} parent=1 // pred_fallthru
      _
    // Predicated region
    $region50: #{tpu_custom_call.1} parent=1 // pred_check
      _
    $region51: #{tpu_custom_call.1} parent=1 // pred_check_branch
      %73 = sbr.rel (0) target = $region53
    $region52: #{tpu_custom_call.1} parent=1 // pred_region
      %75 = vsyncadd [#allocation7], 0
      %s76 = sshll.u32 %s12, 4
      %s77 = int_to_ptr.hbm [resolvable:$true] %s76
      %s78 = sshll.u32 [#allocation8], 4
      %s79 = int_to_ptr.vmem [resolvable:$true] %s78
      %84 = dma.hbm_to_vmem [thread:$0]  %s77, 256, %s79, [#allocation7], 128, 128, 8
    $region53: #{tpu_custom_call.1} parent=1 // pred_fallthru
      _
    // Predicated region
    $region54: #{tpu_custom_call.1} parent=1 // pred_check
      _
    $region55: #{tpu_custom_call.1} parent=1 // pred_check_branch
      %86 = sbr.rel (0) target = $region57
    $region56: #{tpu_custom_call.1} parent=1 // pred_region
      _
    $region57: #{tpu_custom_call.1} parent=1 // pred_fallthru
      _
    // Predicated region
    $region58: #{tpu_custom_call.1} parent=1 // pred_check
      _
    $region59: #{tpu_custom_call.1} parent=1 // pred_check_branch
      %88 = sbr.rel (0) target = $region61
    $region60: #{tpu_custom_call.1} parent=1 // pred_region
      %90 = dma.done [#allocation3], 256
    $region61: #{tpu_custom_call.1} parent=1 // pred_fallthru
      _
    // Predicated region
    $region62: #{tpu_custom_call.1} parent=1 // pred_check
      _
    $region63: #{tpu_custom_call.1} parent=1 // pred_check_branch
      %92 = sbr.rel (0) target = $region65
    $region64: #{tpu_custom_call.1} parent=1 // pred_region
      %94 = dma.done [#allocation7], 512
    $region65: #{tpu_custom_call.1} parent=1 // pred_fallthru
      _
    // Predicated region
    $region66: #{tpu_custom_call.1} parent=1 // pred_check
      _
    $region67: #{tpu_custom_call.1} parent=1 // pred_check_branch
      %96 = sbr.rel (0) target = $region69
    $region68: #{tpu_custom_call.1} parent=1 // pred_region
      %98 = dma.done [#allocation7], 256
    $region69: #{tpu_custom_call.1} parent=1 // pred_fallthru
      _
    %v99 = vld [vmem:[%s0] sm:$0xff]
    %v100 = vld [vmem:[%s0 + $0x8] sm:$0xff]
    %v101 = vld [vmem:[%s2] sm:$0xff]
    %v102 = vld [vmem:[%s2 + $0x8] sm:$0xf]
    %v103 = vld [vmem:[%s2 + $0x10] sm:$0xff]
    %v104 = vld [vmem:[%s2 + $0x18] sm:$0xf]
    %v105 = vld [vmem:[%s1] sm:$0x3f]
    %v106 = vld [vmem:[%s1 + $0x8] sm:$0x3f]
    %vm107 = vcmask 259072
    %v108 = vsel %vm107, %v105, 0.0
    %v109 = vrot.slane %v108, 4
    %v110 = vadd.f32 %v108, %v109
    %v111 = vrot.slane %v110, 2
    %v112 = vadd.f32 %v110, %v111
    %v113 = vrot.slane %v112, 1
    %v114 = vadd.f32 %v112, %v113
    %v115 = vsel %vm107, %v106, 0.0
    %v116 = vrot.slane %v115, 4
    %v117 = vadd.f32 %v115, %v116
    %v118 = vrot.slane %v117, 2
    %v119 = vadd.f32 %v117, %v118
    %v120 = vrot.slane %v119, 1
    %v121 = vadd.f32 %v119, %v120
    %vm122 = vcmask 261120
    %v123 = vsel %vm122, %v99, 0.0
    %v124 = vrot.slane %v123, 4
    %v125 = vadd.f32 %v123, %v124
    %v126 = vrot.slane %v125, 2
    %v127 = vadd.f32 %v125, %v126
    %v128 = vrot.slane %v127, 1
    %v129 = vadd.f32 %v127, %v128
    %v130 = vsel %vm122, %v100, 0.0
    %v131 = vrot.slane %v130, 4
    %v132 = vadd.f32 %v130, %v131
    %v133 = vrot.slane %v132, 2
    %v134 = vadd.f32 %v132, %v133
    %v135 = vrot.slane %v134, 1
    %v136 = vadd.f32 %v134, %v135
    %v137 = vsub.f32 %v114, %v129
    %v138 = vsub.f32 %v121, %v136
    %v139 = vld [vmem:[%s3] sm:$0xff]
    %v140 = vld [vmem:[%s3 + $0x8] sm:$0x3]
    %v141 = vld [vmem:[%s3 + $0x10] sm:$0xff]
    %v142 = vld [vmem:[%s3 + $0x18] sm:$0x3]
    %v143 = vsel %vm122, %v139, 0.0
    %vm144 = vcmask 254976
    %v145 = vsel %vm144, %v140, 0.0
    %v146 = vadd.f32 %v143, %v145
    %v147 = vrot.slane %v146, 4
    %v148 = vadd.f32 %v146, %v147
    %v149 = vrot.slane %v148, 2
    %v150 = vadd.f32 %v148, %v149
    %v151 = vrot.slane %v150, 1
    %v152 = vadd.f32 %v150, %v151
    %v153 = vsel %vm122, %v141, 0.0
    %v154 = vsel %vm144, %v142, 0.0
    %v155 = vadd.f32 %v153, %v154
    %v156 = vrot.slane %v155, 4
    %v157 = vadd.f32 %v155, %v156
    %v158 = vrot.slane %v157, 2
    %v159 = vadd.f32 %v157, %v158
    %v160 = vrot.slane %v159, 1
    %v161 = vadd.f32 %v159, %v160
    %v162 = vsel %vm122, %v101, 0.0
    %vm163 = vcmask 257024
    %v164 = vsel %vm163, %v102, 0.0
    %v165 = vadd.f32 %v162, %v164
    %v166 = vrot.slane %v165, 4
    %v167 = vadd.f32 %v165, %v166
    %v168 = vrot.slane %v167, 2
    %v169 = vadd.f32 %v167, %v168
    %v170 = vrot.slane %v169, 1
    %v171 = vadd.f32 %v169, %v170
    %v172 = vsel %vm122, %v103, 0.0
    %v173 = vsel %vm163, %v104, 0.0
    %v174 = vadd.f32 %v172, %v173
    %v175 = vrot.slane %v174, 4
    %v176 = vadd.f32 %v174, %v175
    %v177 = vrot.slane %v176, 2
    %v178 = vadd.f32 %v176, %v177
    %v179 = vrot.slane %v178, 1
    %v180 = vadd.f32 %v178, %v179
    %v181 = vsub.f32 %v152, %v171
    %v182 = vsub.f32 %v161, %v180
    %vm185 = vcmask 1041409
    %v186 = vsel %vm185, %v138, %v137
    %vm190 = vcmask 1043459
    %v191 = vsel %vm190, %v182, %v181
    %vm193 = vcmask 1041408
    %v194 = vsel %vm193, %v186, %v191
    %v195 = vld [vmem:[%s6] sm:$0xff]
    %v196 = vld [vmem:[%s6 + $0x8] sm:$0xff]
    %v197 = vld [vmem:[%s6 + $0x10] sm:$0xff]
    %v198 = vld [vmem:[%s6 + $0x18] sm:$0xff]
    %v199 = vld [vmem:[%s7] sm:$0x1]
    %v201 = vperm.slane %v199, 0
    %v204 = vsel %vm122, %v194, 0
    %206 = vmatpush.msra.mxu0 0.0
    %207 = vmatpush.msra.mxu0 0.0
    %208 = vmatpush.msra.mxu0 0.0
    %209 = vmatpush.msra.mxu0 0.0
    %210 = vmatpush.msra.mxu0 0.0
    %211 = vmatpush.msra.mxu0 0.0
    %212 = vmatpush.msra.mxu0 0.0
    %213 = vmatpush.msra.mxu0 0.0
    %214 = vmatpush.msra.mxu0 0.0
    %215 = vmatpush.msra.mxu0 0.0
    %216 = vmatpush.msra.mxu0 0.0
    %217 = vmatpush.msra.mxu0 0.0
    %218 = vmatpush.msra.mxu0 %v198
    %219 = vmatpush.msra.mxu0 %v197
    %220 = vmatpush.msra.mxu0 %v196
    %221 = vmatpush.msra.mxu0 %v195
    %222 = vmatmul.f32.gmra.mxu0 %v204
    %v223 = vpop.f32.mrf.mxu0
    %v224 = vadd.f32 %v201, %v223
    %225 = vdwg.mxu0
    %v226 = vand.u32 2147483647, %v224
    %v227 = vsub.f32 0.0, %v226
    %v228 = vadd.f32 %v227, 1.0
    %v229 = vmul.f32 %v224, %v224
    %231 = vrot.lane.b32.xlu0 %v229, 16
    %v232 = vpop.permute.xlu0 %231
    %v234 = vsub.f32 %v228, %v232
    %v235 = vmul.f32 %v227, 1.442695
    %v236 = vpow.pop %v235
    %v237 = vsub.f32 %v234, %v236
    %239 = vrot.lane.b32.xlu0 %v237, 112
    %v240 = vpop.permute.xlu0 %239
    %vm242 = vcmask 123904
    %v243 = vsel %vm242, %v240, 0.0
    %244 = vadd.xlane.f32.xlu0 %v243
    %v245 = vpop.xlane.xlu0 %244
    %v246 = vrot.slane %v245, 4
    %v247 = vadd.f32 %v245, %v246
    %v248 = vrot.slane %v247, 2
    %v249 = vadd.f32 %v247, %v248
    %v250 = vrot.slane %v249, 1
    %v251 = vadd.f32 %v249, %v250
    %s252 = vtos %v251
    %v253 = vrot.slane %v237, 2
    %254 = vrot.lane.b32.xlu0 %v253, 80
    %v255 = vpop.permute.xlu0 %254
    %v257 = vsel %vm242, %v255, 0.0
    %258 = vadd.xlane.f32.xlu0 %v257
    %v259 = vpop.xlane.xlu0 %258
    %v260 = vrot.slane %v259, 4
    %v261 = vadd.f32 %v259, %v260
    %v262 = vrot.slane %v261, 2
    %v263 = vadd.f32 %v261, %v262
    %v264 = vrot.slane %v263, 1
    %v265 = vadd.f32 %v263, %v264
    %s266 = vtos %v265
    %s267 = sadd.f32 %s252, %s266
    %s268 = smul.f32 %s267, -0.5
    %v269 = vrcp.pop 2.0
    %v270 = vmul.f32 2.0, %v269
    %v271 = vsub.f32 1.0, %v270
    %v272 = vmul.f32 %v269, %v271
    %v273 = vadd.f32 %v269, %v272
    %vm274 = vweird.f32 %v269
    %v275 = vsel %vm274, %v269, %v273
    %s276 = vtos %v275
    %s277 = smul.f32 %s268, %s276
    %s278 = scalar_lea.smem [#allocation10], 0
    %279 = sst [smem:[%s278]] %s277
    %v280 = vmul.f32 %v227, 0.5
    %v281 = vmul.f32 %v280, 1.442695
    %v282 = vpow.pop %v281
    %v283 = vld [vmem:[%s4] sm:$0x3]
    %285 = vrot.lane.b32.xlu0 %v283, 16
    %v286 = vpop.permute.xlu0 %285
    %v288 = vmul.f32 %v282, %v286
    %290 = vrot.lane.b32.xlu0 %v288, 112
    %v291 = vpop.permute.xlu0 %290
    %v293 = vadd.f32 %v224, %v291
    %v294 = vld [vmem:[%s5] sm:$0x3]
    %v296 = vrot.slane %v294, 6
    %297 = vrot.lane.b32.xlu0 %v296, 48
    %v298 = vpop.permute.xlu0 %297
    %v300 = vmul.f32 %v282, %v298
    %302 = vrot.lane.b32.xlu0 %v300, 112
    %v303 = vpop.permute.xlu0 %302
    %v305 = vadd.f32 %v224, %v303
    %v306 = vld [vmem:[%s8] sm:$0xff]
    %v307 = vld [vmem:[%s8 + $0x8] sm:$0xff]
    %v308 = vld [vmem:[%s8 + $0x10] sm:$0xff]
    %v309 = vld [vmem:[%s8 + $0x18] sm:$0xff]
    %v310 = vld [vmem:[#allocation2] sm:$0xff]
    %v311 = vld [vmem:[#allocation2 + $0x8] sm:$0xff]
    %v312 = vld [vmem:[%s10] sm:$0x1]
    %v314 = vperm.slane %v312, 0
    %vm316 = vcmask 130048
    %v318 = vsel %vm316, %v293, 0
    %320 = vmatpush.msra.mxu0 0.0
    %321 = vmatpush.msra.mxu0 0.0
    %322 = vmatpush.msra.mxu0 0.0
    %323 = vmatpush.msra.mxu0 0.0
    %324 = vmatpush.msra.mxu0 0.0
    %325 = vmatpush.msra.mxu0 0.0
    %326 = vmatpush.msra.mxu0 0.0
    %327 = vmatpush.msra.mxu0 0.0
    %328 = vmatpush.msra.mxu0 0.0
    %329 = vmatpush.msra.mxu0 0.0
    %330 = vmatpush.msra.mxu0 0.0
    %331 = vmatpush.msra.mxu0 0.0
    %332 = vmatpush.msra.mxu0 0.0
    %333 = vmatpush.msra.mxu0 0.0
    %334 = vmatpush.msra.mxu0 %v311
    %335 = vmatpush.msra.mxu0 %v310
    %336 = vmatmul.f32.gmra.mxu0 %v318
    %v337 = vpop.f32.mrf.mxu0
    %v338 = vadd.f32 %v314, %v337
    %339 = vdwg.mxu0
    %v341 = vsel %vm122, %v99, 0
    %v344 = vsel %vm122, %v100, 0
    %346 = vmatpush.msra.mxu0 0.0
    %347 = vmatpush.msra.mxu0 0.0
    %348 = vmatpush.msra.mxu0 0.0
    %349 = vmatpush.msra.mxu0 0.0
    %350 = vmatpush.msra.mxu0 0.0
    %351 = vmatpush.msra.mxu0 0.0
    %352 = vmatpush.msra.mxu0 0.0
    %353 = vmatpush.msra.mxu0 0.0
    %354 = vmatpush.msra.mxu0 0.0
    %355 = vmatpush.msra.mxu0 0.0
    %356 = vmatpush.msra.mxu0 0.0
    %357 = vmatpush.msra.mxu0 0.0
    %358 = vmatpush.msra.mxu0 %v309
    %359 = vmatpush.msra.mxu0 %v308
    %360 = vmatpush.msra.mxu0 %v307
    %361 = vmatpush.msra.mxu0 %v306
    %362 = vmatmul.f32.gmra.mxu0 %v341
    %v363 = vpop.f32.mrf.mxu0
    %v364 = vadd.f32 0.0, %v363
    %365 = vmatmul.f32.gmra.mxu0 %v344
    %v366 = vpop.f32.mrf.mxu0
    %v367 = vadd.f32 0.0, %v366
    %368 = vdwg.mxu0
    %v370 = vrot.slane %v338, 1
    %v371 = vperm.slane %v338, 0
    %v372 = vperm.slane %v370, 0
    %v375 = vadd.f32 %v364, %v371
    %v376 = vadd.f32 %v367, %v372
    %v377 = vmax.f32 %v375, 0.0
    %v378 = vmax.f32 %v376, 0.0
    %379 = vst.msk [vmem:[#allocation9] sm:$0xff] %vm122, %v377
    %380 = vst.msk [vmem:[#allocation9 + $0x8] sm:$0xff] %vm122, %v378
    %v381 = vld [vmem:[#allocation6] sm:$0xff]
    %v382 = vld [vmem:[#allocation6 + $0x8] sm:$0xff]
    %v383 = vld [vmem:[#allocation6 + $0x10] sm:$0xff]
    %v384 = vld [vmem:[#allocation6 + $0x18] sm:$0xff]
    %v385 = vld [vmem:[#allocation8] sm:$0xff]
    %v386 = vld [vmem:[#allocation8 + $0x8] sm:$0xff]
    %v387 = vld [vmem:[%s13] sm:$0x1]
    %v389 = vperm.slane %v387, 0
    %v392 = vrot.slane %v305, 2
    %393 = vrot.lane.b32.xlu0 %v392, 96
    %v394 = vpop.permute.xlu0 %393
    %v395 = vsel %vm316, %v394, 0
    %397 = vmatpush.msra.mxu0 0.0
    %398 = vmatpush.msra.mxu0 0.0
    %399 = vmatpush.msra.mxu0 0.0
    %400 = vmatpush.msra.mxu0 0.0
    %401 = vmatpush.msra.mxu0 0.0
    %402 = vmatpush.msra.mxu0 0.0
    %403 = vmatpush.msra.mxu0 0.0
    %404 = vmatpush.msra.mxu0 0.0
    %405 = vmatpush.msra.mxu0 0.0
    %406 = vmatpush.msra.mxu0 0.0
    %407 = vmatpush.msra.mxu0 0.0
    %408 = vmatpush.msra.mxu0 0.0
    %409 = vmatpush.msra.mxu0 0.0
    %410 = vmatpush.msra.mxu0 0.0
    %411 = vmatpush.msra.mxu0 %v386
    %412 = vmatpush.msra.mxu0 %v385
    %413 = vmatmul.f32.gmra.mxu0 %v395
    %v414 = vpop.f32.mrf.mxu0
    %v415 = vadd.f32 %v389, %v414
    %416 = vdwg.mxu0
    %v421 = vrot.slane %v101, 4
    %v422 = vrot.slane %v103, 4
    %423 = vst [vmem:[#allocation1] ss:$2 sm:$0xff] %v101
    %s424 = scalar_lea.vmem [#allocation1], 1
    %425 = vst [vmem:[%s424] ss:$2 sm:$0xff] %v421
    %s426 = scalar_lea.vmem [#allocation1], 16
    %427 = vst [vmem:[%s426] ss:$2 sm:$0xff] %v102
    %s428 = scalar_lea.vmem [#allocation1], 17
    %429 = vst [vmem:[%s428] ss:$2 sm:$0xff] %v103
    %s430 = scalar_lea.vmem [#allocation1], 32
    %431 = vst [vmem:[%s430] ss:$2 sm:$0xff] %v422
    %s432 = scalar_lea.vmem [#allocation1], 33
    %433 = vst [vmem:[%s432] ss:$2 sm:$0xff] %v104
    %v434 = vld.sshfl [vmem:[#allocation1] sm:$0xff pattern:$0x75316420]
    %v435 = vld.sshfl [vmem:[#allocation1 + $0x10] sm:$0xff pattern:$0x75316420]
    %v436 = vld.sshfl [vmem:[#allocation1 + $0x20] sm:$0xff pattern:$0x75316420]
    %v437 = vsel %vm122, %v434, 0
    %v439 = vsel %vm122, %v435, 0
    %v441 = vsel %vm122, %v436, 0
    %443 = vmatpush.msra.mxu0 0.0
    %444 = vmatpush.msra.mxu0 0.0
    %445 = vmatpush.msra.mxu0 0.0
    %446 = vmatpush.msra.mxu0 0.0
    %447 = vmatpush.msra.mxu0 0.0
    %448 = vmatpush.msra.mxu0 0.0
    %449 = vmatpush.msra.mxu0 0.0
    %450 = vmatpush.msra.mxu0 0.0
    %451 = vmatpush.msra.mxu0 0.0
    %452 = vmatpush.msra.mxu0 0.0
    %453 = vmatpush.msra.mxu0 0.0
    %454 = vmatpush.msra.mxu0 0.0
    %455 = vmatpush.msra.mxu0 %v384
    %456 = vmatpush.msra.mxu0 %v383
    %457 = vmatpush.msra.mxu0 %v382
    %458 = vmatpush.msra.mxu0 %v381
    %459 = vmatmul.f32.gmra.mxu0 %v437
    %v460 = vpop.f32.mrf.mxu0
    %v461 = vadd.f32 0.0, %v460
    %462 = vmatmul.f32.gmra.mxu0 %v439
    %v463 = vpop.f32.mrf.mxu0
    %v464 = vadd.f32 0.0, %v463
    %465 = vmatmul.f32.gmra.mxu0 %v441
    %v466 = vpop.f32.mrf.mxu0
    %v467 = vadd.f32 0.0, %v466
    %468 = vdwg.mxu0
    %v472 = vrot.slane %v461, 4
    %v473 = vrot.slane %v464, 4
    %v474 = vrot.slane %v467, 4
    %v479 = vrot.slane %v415, 1
    %v480 = vperm.slane %v415, 0
    %v481 = vperm.slane %v479, 0
    %v484 = vrot.slane %v480, 4
    %v485 = vrot.slane %v481, 4
    %v488 = vadd.f32 %v461, %v480
    %v489 = vadd.f32 %v472, %v484
    %v490 = vadd.f32 %v464, %v480
    %v491 = vadd.f32 %v473, %v481
    %v492 = vadd.f32 %v467, %v485
    %v493 = vadd.f32 %v474, %v481
    %v494 = vmax.f32 %v488, 0.0
    %v495 = vmax.f32 %v489, 0.0
    %v496 = vmax.f32 %v490, 0.0
    %v497 = vmax.f32 %v491, 0.0
    %v498 = vmax.f32 %v492, 0.0
    %v499 = vmax.f32 %v493, 0.0
    %506 = vst [vmem:[#allocation1] ss:$2 sm:$0xff] %v494
    %s507 = scalar_lea.vmem [#allocation1], 1
    %508 = vst [vmem:[%s507] ss:$2 sm:$0xff] %v495
    %s509 = scalar_lea.vmem [#allocation1], 16
    %510 = vst [vmem:[%s509] ss:$2 sm:$0xff] %v496
    %v511 = vld.sshfl [vmem:[#allocation1] sm:$0xff pattern:$0x75316420]
    %v512 = vld.sshfl [vmem:[#allocation1 + $0x10] sm:$0xff pattern:$0x75316420]
    %s513 = scalar_lea.vmem [#allocation1], 32
    %514 = vst [vmem:[%s513] ss:$2 sm:$0xff] %v497
    %s515 = scalar_lea.vmem [#allocation1], 33
    %516 = vst [vmem:[%s515] ss:$2 sm:$0xff] %v498
    %s517 = scalar_lea.vmem [#allocation1], 48
    %518 = vst [vmem:[%s517] ss:$2 sm:$0xff] %v499
    %v519 = vld.sshfl [vmem:[#allocation1 + $0x20] sm:$0xff pattern:$0x75316420]
    %v520 = vld.sshfl [vmem:[#allocation1 + $0x30] sm:$0xff pattern:$0x75316420]
    %525 = vst.msk [vmem:[%s15] sm:$0xff] %vm122, %v511
    %526 = vst.msk [vmem:[%s15 + $0x8] sm:$0xf] %vm163, %v512
    %527 = vst.msk [vmem:[%s15 + $0x10] sm:$0xff] %vm122, %v519
    %528 = vst.msk [vmem:[%s15 + $0x18] sm:$0xf] %vm163, %v520
    // Predicated region
    $region70: #{tpu_custom_call.1} parent=1 // pred_check
      _
    $region71: #{tpu_custom_call.1} parent=1 // pred_check_branch
      %530 = sbr.rel (0) target = $region73
    $region72: #{tpu_custom_call.1} parent=1 // pred_region
      %532 = vsyncadd [#allocation4], 0
      %s533 = sshll.u32 [#allocation9], 4
      %s534 = int_to_ptr.vmem [resolvable:$true] %s533
      %s535 = sshll.u32 %s14, 4
      %s536 = int_to_ptr.hbm [resolvable:$true] %s535
      %541 = dma.vmem_to_hbm [thread:$0]  %s534, 256, %s536, [#allocation4], 128, 128, 8
    $region73: #{tpu_custom_call.1} parent=1 // pred_fallthru
      _
    // Predicated region
    $region74: #{tpu_custom_call.1} parent=1 // pred_check
      _
    $region75: #{tpu_custom_call.1} parent=1 // pred_check_branch
      %543 = sbr.rel (0) target = $region77
    $region76: #{tpu_custom_call.1} parent=1 // pred_region
      _
    $region77: #{tpu_custom_call.1} parent=1 // pred_fallthru
      _
    // Predicated region
    $region78: #{tpu_custom_call.1} parent=1 // pred_check
      _
    $region79: #{tpu_custom_call.1} parent=1 // pred_check_branch
      %545 = sbr.rel (0) target = $region81
    $region80: #{tpu_custom_call.1} parent=1 // pred_region
      %547 = vsyncadd [#allocation5], 0
      %s549 = sshll.u32 %s16, 4
      %s550 = int_to_ptr.hbm [resolvable:$true] %s549
      %552 = dma.smem_to_hbm [#allocation10], 16, %s550, [#allocation5]
    $region81: #{tpu_custom_call.1} parent=1 // pred_fallthru
      _
    // Predicated region
    $region82: #{tpu_custom_call.1} parent=1 // pred_check
      _
    $region83: #{tpu_custom_call.1} parent=1 // pred_check_branch
      %554 = sbr.rel (0) target = $region85
    $region84: #{tpu_custom_call.1} parent=1 // pred_region
      %556 = dma.done [#allocation4], 256
    $region85: #{tpu_custom_call.1} parent=1 // pred_fallthru
      _
    // Predicated region
    $region86: #{tpu_custom_call.1} parent=1 // pred_check
      _
    $region87: #{tpu_custom_call.1} parent=1 // pred_check_branch
      %558 = sbr.rel (0) target = $region89
    $region88: #{tpu_custom_call.1} parent=1 // pred_region
      _
    $region89: #{tpu_custom_call.1} parent=1 // pred_fallthru
      _
    // Predicated region
    $region90: #{tpu_custom_call.1} parent=1 // pred_check
      _
    $region91: #{tpu_custom_call.1} parent=1 // pred_check_branch
      %560 = sbr.rel (0) target = $region93
    $region92: #{tpu_custom_call.1} parent=1 // pred_region
      %562 = dma.done [#allocation5], 16
    $region93: #{tpu_custom_call.1} parent=1 // pred_fallthru
      _
    %563 = sfence
    %564 = vsyncpa [#allocation3], 1
    %565 = vsyncpa [#allocation7], 1
    %566 = vsyncpa [#allocation4], 1
    %567 = vsyncpa [#allocation5], 1

</llo_original>
